<compile_context>
chip_gen: v5e
topology: v5e:2x2
jax: 0.10.0
libtpu: 0.0.40
codegen_flags: <defaults>
</compile_context>

<pallas_src>
import functools

import jax
import jax.numpy as jnp
from jax.experimental import pallas as pl
from jax.experimental.pallas import tpu as pltpu


def _correlation_kernel(fs_ref, ft_ref, out_ref, acc_ref, *, inv_bm1):
    k = pl.program_id(0)

    @pl.when(k == 0)
    def _init():
        acc_ref[0] = jnp.float32(0.0)

    # Elementwise |f_s - f_t| on the VPU; compute in f32 regardless of the
    # storage dtype (v5e has no bf16 VALU path; the cast is a free convert).
    delta = jnp.abs(fs_ref[...].astype(jnp.float32) - ft_ref[...].astype(jnp.float32))
    b = delta.shape[0]

    # rolled[i, :] = delta[(i+1) % B, :]  (positive shift of B-1 == shift -1).
    # XLU roll instead of two sublane-misaligned slices.
    rolled = pltpu.roll(delta, shift=b - 1, axis=0)
    prod = delta * rolled

    # Drop the wrap-around row (i == B-1) with a select instead of a slice.
    row_ids = jax.lax.broadcasted_iota(jnp.int32, prod.shape, 0)
    prod = jnp.where(row_ids < b - 1, prod, 0.0)

    acc_ref[0] += jnp.sum(prod)

    @pl.when(k == pl.num_programs(0) - 1)
    def _finalize():
        # Constant multiply instead of a divide on the serial epilogue.
        out_ref[0, 0] = acc_ref[0] * jnp.float32(inv_bm1)


def _choose_feature_tile(B, D, itemsize, max_tile_bytes):
    """Largest feature tile TD such that 2 inputs x 2 pipeline buffers of a
    (B, TD) block stays under max_tile_bytes (conservative default so the
    same sizing is safe on v7x's smaller 64 MiB VMEM / 32 MiB scoped default).
    TD is either the full D (no tiling) or a multiple of 128 that divides D,
    so partial feature tiles never need masking."""
    full_cost = 4 * B * D * itemsize  # 2 inputs x 2 pipeline buffers
    if full_cost <= max_tile_bytes or D % 128 != 0:
        return D
    td = max((max_tile_bytes // (4 * B * itemsize)) // 128 * 128, 128)
    td = min(td, D)
    while D % td != 0:
        td -= 128
    return td


def correlation_loss(f_s, f_t, *, max_tile_bytes=4 * 1024 * 1024):
    """Pallas TPU implementation of Correlation.forward. f_s, f_t: (B, D)."""
    assert f_s.shape == f_t.shape and f_s.ndim == 2
    B, D = f_s.shape
    assert B >= 2, "Correlation loss needs at least 2 rows (mean over B-1 pairs)."

    td = _choose_feature_tile(B, D, jnp.dtype(f_s.dtype).itemsize, max_tile_bytes)
    grid = (D // td,)

    kernel = functools.partial(_correlation_kernel, inv_bm1=1.0 / (B - 1))

    out = pl.pallas_call(
        kernel,
        out_shape=jax.ShapeDtypeStruct((1, 1), jnp.float32),
        grid=grid,
        in_specs=[
            pl.BlockSpec((B, td), lambda k: (0, k)),
            pl.BlockSpec((B, td), lambda k: (0, k)),
        ],
        # Scalar result lives in SMEM: avoids the masked (1,1) VMEM store path.
        out_specs=pl.BlockSpec(memory_space=pltpu.MemorySpace.SMEM),
        scratch_shapes=[pltpu.SMEM((1,), jnp.float32)],
        compiler_params=pltpu.CompilerParams(
            dimension_semantics=("arbitrary",),  # feature axis is a reduction
        ),
    )(f_s, f_t)
    return out[0, 0]


def _reference(f_s, f_t):
    delta = jnp.abs(f_s.astype(jnp.float32) - f_t.astype(jnp.float32))
    return jnp.mean(jnp.sum(delta[:-1] * delta[1:], axis=1))


if __name__ == "__main__":
    key = jax.random.PRNGKey(0)
    k1, k2, k3, k4 = jax.random.split(key, 4)

    # Small demo shape (batch=8, hidden=32): single (B, D) block, grid=(1,).
    # NOTE: at this size wall-clock is pure launch/DMA overhead; batch many
    # pairs or let XLA fuse it for real workloads of this size.
    B, D = 8, 32
    f_s = jax.random.normal(k1, (B, D), dtype=jnp.float32)
    f_t = jax.random.normal(k2, (B, D), dtype=jnp.float32)
    loss = correlation_loss(f_s, f_t)
    jax.block_until_ready(loss)
    ref = _reference(f_s, f_t)
    assert jnp.allclose(loss, ref, rtol=1e-5, atol=1e-5), (loss, ref)

    # Second case exercises the tiled/accumulator path: D=384 forced into
    # three (8, 128) feature tiles (grid=(3,)).
    B2, D2 = 8, 384
    g_s = jax.random.normal(k3, (B2, D2), dtype=jnp.float32)
    g_t = jax.random.normal(k4, (B2, D2), dtype=jnp.float32)
    loss2 = correlation_loss(g_s, g_t, max_tile_bytes=4 * B2 * 128 * 4)
    jax.block_until_ready(loss2)
    ref2 = _reference(g_s, g_t)
    assert jnp.allclose(loss2, ref2, rtol=1e-5, atol=1e-5), (loss2, ref2)

    print("KERNEL_OK")
</pallas_src>

<mosaic_0001>
module attributes {stable_mosaic.version = 11 : i64} {
  func.func @_correlation_kernel(%arg0: i32, %arg1: memref<8x32xf32, #tpu.memory_space<vmem>>, %arg2: memref<8x32xf32, #tpu.memory_space<vmem>>, %arg3: memref<1x1xf32, #tpu.memory_space<smem>>, %arg4: memref<1xf32, #tpu.memory_space<smem>>) attributes {dimension_semantics = [#tpu.dimension_semantics<arbitrary>], iteration_bounds = array<i64: 1>, scalar_prefetch = 0 : i64, scratch_operands = 1 : i64, tpu.core_type = #tpu.core_type<tc>, window_params = [{transform_indices = @transform_0, window_bounds = array<i64: 8, 32>}, {transform_indices = @transform_1, window_bounds = array<i64: 8, 32>}, {transform_indices = @transform_2, window_bounds = array<i64: 1, 1>}]} {
    %c0_i32 = arith.constant 0 : i32
    %0 = arith.cmpi eq, %arg0, %c0_i32 : i32
    %1 = arith.extui %0 : i1 to i32
    %c0_i32_0 = arith.constant 0 : i32
    %2 = arith.cmpi ne, %1, %c0_i32_0 : i32
    scf.if %2 {
      %cst_10 = arith.constant 0.000000e+00 : f32
      %c0_11 = arith.constant 0 : index
      %24 = memref.load %arg4[%c0_11] : memref<1xf32, #tpu.memory_space<smem>>
      memref.store %cst_10, %arg4[%c0_11] : memref<1xf32, #tpu.memory_space<smem>>
    } else {
    }
    %c0 = arith.constant 0 : index
    %c0_1 = arith.constant 0 : index
    %3 = vector.load %arg1[%c0, %c0_1] : memref<8x32xf32, #tpu.memory_space<vmem>>, vector<8x32xf32>
    %c0_2 = arith.constant 0 : index
    %c0_3 = arith.constant 0 : index
    %4 = vector.load %arg2[%c0_2, %c0_3] : memref<8x32xf32, #tpu.memory_space<vmem>>, vector<8x32xf32>
    %5 = arith.subf %3, %4 : vector<8x32xf32>
    %6 = math.absf %5 : vector<8x32xf32>
    %c7_i32 = arith.constant 7 : i32
    %7 = tpu.dynamic_rotate %6 by %c7_i32 dim 0 : vector<8x32xf32>, i32 -> vector<8x32xf32>
    %8 = arith.mulf %6, %7 : vector<8x32xf32>
    %9 = tpu.iota {dimensions = array<i32: 0>} : vector<8x32xi32>
    %c7_i32_4 = arith.constant 7 : i32
    %10 = vector.broadcast %c7_i32_4 : i32 to vector<8x32xi32>
    %11 = arith.cmpi slt, %9, %10 : vector<8x32xi32>
    %cst = arith.constant 0.000000e+00 : f32
    %12 = vector.broadcast %cst : f32 to vector<8x32xf32>
    %13 = arith.select %11, %8, %12 : vector<8x32xi1>, vector<8x32xf32>
    %c0_5 = arith.constant 0 : index
    %14 = memref.load %arg4[%c0_5] : memref<1xf32, #tpu.memory_space<smem>>
    %15 = vector.shape_cast %13 : vector<8x32xf32> to vector<1x8x32xf32>
    %cst_6 = arith.constant dense<0.000000e+00> : vector<1xf32>
    %16 = vector.multi_reduction <add>, %15, %cst_6 [1, 2] : vector<1x8x32xf32> to vector<1xf32>
    %17 = vector.shape_cast %16 : vector<1xf32> to vector<1x1x1xf32>
    %18 = vector.extract %17[0, 0, 0] : f32 from vector<1x1x1xf32>
    %19 = arith.addf %14, %18 : f32
    %c0_7 = arith.constant 0 : index
    %20 = memref.load %arg4[%c0_7] : memref<1xf32, #tpu.memory_space<smem>>
    memref.store %19, %arg4[%c0_7] : memref<1xf32, #tpu.memory_space<smem>>
    %c0_i32_8 = arith.constant 0 : i32
    %21 = arith.cmpi eq, %arg0, %c0_i32_8 : i32
    %22 = arith.extui %21 : i1 to i32
    %c0_i32_9 = arith.constant 0 : i32
    %23 = arith.cmpi ne, %22, %c0_i32_9 : i32
    scf.if %23 {
      %c0_10 = arith.constant 0 : index
      %24 = memref.load %arg4[%c0_10] : memref<1xf32, #tpu.memory_space<smem>>
      %cst_11 = arith.constant 0.142857149 : f32
      %25 = arith.mulf %24, %cst_11 : f32
      %c0_12 = arith.constant 0 : index
      %c0_13 = arith.constant 0 : index
      %26 = memref.load %arg3[%c0_12, %c0_13] : memref<1x1xf32, #tpu.memory_space<smem>>
      memref.store %25, %arg3[%c0_12, %c0_13] : memref<1x1xf32, #tpu.memory_space<smem>>
    } else {
    }
    return
  }
  func.func @transform_0(%arg0: i32) -> (i32, i32) {
    %c0_i32 = arith.constant 0 : i32
    %c0_i32_0 = arith.constant 0 : i32
    return %c0_i32, %arg0 : i32, i32
  }
  func.func @transform_1(%arg0: i32) -> (i32, i32) {
    %c0_i32 = arith.constant 0 : i32
    %c0_i32_0 = arith.constant 0 : i32
    return %c0_i32, %arg0 : i32, i32
  }
  func.func @transform_2(%arg0: i32) -> (i32, i32) {
    %c0_i32 = arith.constant 0 : i32
    %c0_i32_0 = arith.constant 0 : i32
    %c0_i32_1 = arith.constant 0 : i32
    return %c0_i32, %c0_i32_0 : i32, i32
  }
}

</mosaic_0001>

<llo_original>
// kernel: tpu_custom_call.1
$region0: #{tpu_custom_call.1}
  #allocation0 [shape = 'u32[]', space=smem, size = 0x4, offset = 0x4, fixed_abs, tag = 'smem constant byte address 0x4 - core index']
  #allocation1 [shape = 'u32[72,128]{1,0:T(1,128)}', space=vmem, size = 0x9000, scoped, tag = 'internal scratch']
  #allocation2 [shape = 'f32[1]{0:T(128)}', space=smem, size = 0x200, scoped, tag = 'scratch operand']
  %s0 = inlined_call_operand.hbm [shape: f32[8,32], index: 0, kind: input, shape index: {}]
  %s1 = inlined_call_operand.hbm [shape: f32[8,32], index: 1, kind: input, shape index: {}]
  %s2 = inlined_call_operand.hbm [shape: f32[1,1], index: 2, kind: output, shape index: {}]
  %s3 = sld [smem:[#allocation0]]
  $region34: #{tpu_custom_call.1} parent=0
    _
  %s5 = ssub.s32 1, %s3
  %s6 = scalar_select 0, %s5, %s3
  $region1: #{tpu_custom_call.1} parent=0
    #allocation3 [shape = 'u8[4096]{0}', space=vmem, size = 0x1000, scoped, tag = 'input window, operand 0, single buffered']
    #allocation4 [shape = 's32[1]{0}', space=sflag, size = 0x4, scoped, tag = 'scoped memory for tpu_custom_call.1']
    #allocation5 [shape = 's32[1]{0}', space=sflag, size = 0x4, scoped, tag = 'scoped memory for tpu_custom_call.1']
    #allocation6 [shape = 'u8[4096]{0}', space=vmem, size = 0x1000, scoped, tag = 'input window, operand 1, single buffered']
    #allocation7 [shape = 's32[1]{0}', space=sflag, size = 0x4, scoped, tag = 'scoped memory for tpu_custom_call.1']
    #allocation8 [shape = 'u8[512]{0}', space=smem, size = 0x200, scoped, tag = 'output window, operand 0, single buffered']
    %7 = vsyncpa [#allocation4], 0
    %8 = vsyncpa [#allocation7], 0
    %9 = vsyncpa [#allocation5], 0
    // Predicated region
    $region2: #{tpu_custom_call.1} parent=1 // pred_check
      _
    $region3: #{tpu_custom_call.1} parent=1 // pred_check_branch
      %11 = sbr.rel (0) target = $region5
    $region4: #{tpu_custom_call.1} parent=1 // pred_region
      %13 = vsyncadd [#allocation4], 0
      %s15 = sshll.u32 %s0, 4
      %s16 = int_to_ptr.hbm [resolvable:$true] %s15
      %s17 = sshll.u32 [#allocation3], 4
      %s18 = int_to_ptr.vmem [resolvable:$true] %s17
      %20 = dma.hbm_to_vmem [thread:$0]  %s16, 128, %s18, [#allocation4]
    $region5: #{tpu_custom_call.1} parent=1 // pred_fallthru
      _
    // Predicated region
    $region6: #{tpu_custom_call.1} parent=1 // pred_check
      _
    $region7: #{tpu_custom_call.1} parent=1 // pred_check_branch
      %22 = sbr.rel (0) target = $region9
    $region8: #{tpu_custom_call.1} parent=1 // pred_region
      %24 = vsyncadd [#allocation7], 0
      %s26 = sshll.u32 %s1, 4
      %s27 = int_to_ptr.hbm [resolvable:$true] %s26
      %s28 = sshll.u32 [#allocation6], 4
      %s29 = int_to_ptr.vmem [resolvable:$true] %s28
      %31 = dma.hbm_to_vmem [thread:$0]  %s27, 128, %s29, [#allocation7]
    $region9: #{tpu_custom_call.1} parent=1 // pred_fallthru
      _
    // Predicated region
    $region10: #{tpu_custom_call.1} parent=1 // pred_check
      _
    $region11: #{tpu_custom_call.1} parent=1 // pred_check_branch
      %33 = sbr.rel (0) target = $region13
    $region12: #{tpu_custom_call.1} parent=1 // pred_region
      %35 = dma.done [#allocation4], 128
    $region13: #{tpu_custom_call.1} parent=1 // pred_fallthru
      _
    // Predicated region
    $region14: #{tpu_custom_call.1} parent=1 // pred_check
      _
    $region15: #{tpu_custom_call.1} parent=1 // pred_check_branch
      %37 = sbr.rel (0) target = $region17
    $region16: #{tpu_custom_call.1} parent=1 // pred_region
      %39 = dma.done [#allocation7], 128
    $region17: #{tpu_custom_call.1} parent=1 // pred_fallthru
      _
    %p40 = scmp.eq.s32.totalorder 0, 0
    // Predicated region
    $region18: #{tpu_custom_call.1} parent=1 // pred_check
      %p41 = pneg %p40
    $region19: #{tpu_custom_call.1} parent=1 // pred_check_branch
      %43 = sbr.rel (%p41) target = $region21
    $region20: #{tpu_custom_call.1} parent=1 // pred_region
      %s44 = scalar_lea.smem [#allocation2], 0
      %45 = sst [smem:[%s44]] 0.0
    $region21: #{tpu_custom_call.1} parent=1 // pred_fallthru
      _
    %v46 = vld [vmem:[#allocation3] sm:$0xff]
    %v47 = vld [vmem:[#allocation6] sm:$0xff]
    %v48 = vsub.f32 %v46, %v47
    %v49 = vand.u32 2147483647, %v48
    %v50 = vrot.slane %v49, 1
    %v51 = vmul.f32 %v49, %v50
    %v52 = vlaneseq
    %v53 = vshrl.u32 %v52, 7
    %vm54 = vcmp.lt.s32.totalorder %v53, 7
    %v55 = vsel %vm54, %v51, 0.0
    %s56 = sld [smem:[#allocation2]]
    %vm57 = vcmask 261120
    %v58 = vsel %vm57, %v55, 0.0
    %59 = vadd.xlane.f32.xlu0 %v58
    %v60 = vpop.xlane.xlu0 %59
    %v61 = vrot.slane %v60, 4
    %v62 = vadd.f32 %v60, %v61
    %v63 = vrot.slane %v62, 2
    %v64 = vadd.f32 %v62, %v63
    %v65 = vrot.slane %v64, 1
    %v66 = vadd.f32 %v64, %v65
    %s67 = vtos %v66
    %s68 = sadd.f32 %s56, %s67
    %s69 = scalar_lea.smem [#allocation2], 0
    %70 = sst [smem:[%s69]] %s68
    // Predicated region
    $region22: #{tpu_custom_call.1} parent=1 // pred_check
      %p71 = pneg %p40
    $region23: #{tpu_custom_call.1} parent=1 // pred_check_branch
      %73 = sbr.rel (%p71) target = $region25
    $region24: #{tpu_custom_call.1} parent=1 // pred_region
      %s74 = sld [smem:[#allocation2]]
      %s75 = smul.f32 %s74, 0.14285715
      %s76 = scalar_lea.smem [#allocation8], 0
      %77 = sst [smem:[%s76]] %s75
    $region25: #{tpu_custom_call.1} parent=1 // pred_fallthru
      _
    // Predicated region
    $region26: #{tpu_custom_call.1} parent=1 // pred_check
      _
    $region27: #{tpu_custom_call.1} parent=1 // pred_check_branch
      %79 = sbr.rel (0) target = $region29
    $region28: #{tpu_custom_call.1} parent=1 // pred_region
      %81 = vsyncadd [#allocation5], 0
      %s83 = sshll.u32 %s2, 4
      %s84 = int_to_ptr.hbm [resolvable:$true] %s83
      %86 = dma.smem_to_hbm [#allocation8], 16, %s84, [#allocation5]
    $region29: #{tpu_custom_call.1} parent=1 // pred_fallthru
      _
    // Predicated region
    $region30: #{tpu_custom_call.1} parent=1 // pred_check
      _
    $region31: #{tpu_custom_call.1} parent=1 // pred_check_branch
      %88 = sbr.rel (0) target = $region33
    $region32: #{tpu_custom_call.1} parent=1 // pred_region
      %90 = dma.done [#allocation5], 16
    $region33: #{tpu_custom_call.1} parent=1 // pred_fallthru
      _
    %91 = sfence
    %92 = vsyncpa [#allocation4], 1
    %93 = vsyncpa [#allocation7], 1
    %94 = vsyncpa [#allocation5], 1

</llo_original>
